<compile_context>
chip_gen: v7x
topology: tpu7x:2x2x1
jax: 0.10.0
libtpu: 0.0.40
codegen_flags: <defaults>
</compile_context>

<pallas_src>
import functools

import jax
import jax.numpy as jnp
from jax.experimental import pallas as pl
from jax.experimental.pallas import tpu as pltpu


def _round_up(n, m):
    return ((n + m - 1) // m) * m


def _conv1d_relu_kernel(x_ref, w_ref, b_ref, o_ref, *, bt, width, pad, ksize,
                        zpad, compute_dtype):
    """One batch block per grid step; everything stays in VMEM / vregs.

    x_ref: (bt, W, F)   input block, original dtype (cast to compute_dtype here)
    w_ref: (K, F, F)    folded Conv1d weight (k, in, out), resident across grid
    b_ref: (1, F)       f32 bias, resident across grid
    o_ref: (bt, W, F)   output block, final dtype (no post-kernel pass needed)
    """
    rows = bt * width
    n_out = w_ref.shape[-1]

    # Flatten the block to (bt*W, F): every tap then feeds ONE matmul with
    # bt*W LHS rows, amortizing the resident-weight push over the whole block.
    parts = [x_ref[b].astype(compute_dtype) for b in range(bt)]
    x2 = parts[0] if bt == 1 else jnp.concatenate(parts, axis=0)
    n_in = x2.shape[-1]

    # ConstantPad1d folded into the kernel: zero rows on both ends of the time
    # axis, built in registers (no wrapper-side HBM pad pass).  The zero blocks
    # are sublane-tile sized so the concatenation pieces stay aligned.
    zeros = jnp.zeros((zpad, n_in), dtype=compute_dtype)
    xz = jnp.concatenate([zeros, x2, zeros], axis=0)        # (rows + 2*zpad, F)

    # Rows whose tap source would cross an interior batch boundary (only
    # possible when several batch elements share one block).
    if bt > 1:
        t_idx = jax.lax.broadcasted_iota(jnp.int32, (rows, n_in), 0) % width

    # Per-tap accumulation: K shifted views x one (F, F) weight each, all
    # accumulated into a single f32 accumulator (no im2col temp).
    acc = jnp.zeros((rows, n_out), dtype=jnp.float32)
    for k in range(ksize):
        d = k - pad                                         # tap offset in time
        start = zpad + d
        xk = xz[start:start + rows, :]                      # row r holds x[r + d]
        if bt > 1 and d != 0:
            valid = jnp.logical_and(t_idx + d >= 0, t_idx + d < width)
            xk = jnp.where(valid, xk, jnp.zeros_like(xk))
        acc = acc + jnp.dot(xk, w_ref[k], preferred_element_type=jnp.float32)

    y = jnp.maximum(acc + b_ref[...], 0.0)                  # bias + ReLU in f32
    for b in range(bt):
        o_ref[b] = y[b * width:(b + 1) * width, :].astype(o_ref.dtype)


def fold_conv_params(weight, bias, *, compute_dtype=jnp.bfloat16):
    """One-time parameter fold (call at module init / load, NOT per forward).

    PyTorch Conv1d weight (F_out, F_in, K) -> (K, F_in, F_out) in the MXU
    compute dtype (bf16 by default, f32 accumulation happens in-kernel);
    bias (F_out,) -> (1, F_out) f32.
    """
    w = jnp.transpose(jnp.asarray(weight), (2, 1, 0)).astype(compute_dtype)
    b = jnp.asarray(bias).astype(jnp.float32).reshape(1, -1)
    return w, b


def _pick_block_batch(batch, width, *, target_rows=256, max_bt=8):
    # Keep >= 2 grid steps when batch >= 2 so the "parallel" grid axis can be
    # sharded across both TensorCores on dual-TC chips; otherwise grow bt until
    # bt*W presents enough LHS rows to the MXU.
    cap = max(1, batch // 2)
    want = max(1, -(-target_rows // max(width, 1)))         # ceil(target / W)
    bt = max(1, min(cap, max_bt, want))
    while batch % bt:
        bt -= 1
    return bt


def conv_layer_pallas(x, w_folded, b_folded, *, kernel_size=7, out_dtype=None,
                      block_batch=None):
    """ConvLayer forward.  x: (B, W, F); (w_folded, b_folded) from fold_conv_params."""
    B, W, F = x.shape
    K = kernel_size
    # ConstantPad1d((K-1)//2) + Conv1d(k=K) only preserves the width for odd K.
    assert K % 2 == 1, "only odd kernel_size keeps output width == window size"
    assert w_folded.shape == (K, F, F), w_folded.shape
    assert b_folded.shape == (1, F), b_folded.shape
    pad = (K - 1) // 2
    out_dtype = jnp.dtype(x.dtype if out_dtype is None else out_dtype)

    bt = _pick_block_batch(B, W) if block_batch is None else max(1, min(block_batch, B))
    while B % bt:
        bt -= 1

    # Zero block used for the in-kernel time padding (sublane-tile aligned).
    zpad = _round_up(max(pad, 1), 16)

    kernel = functools.partial(
        _conv1d_relu_kernel, bt=bt, width=W, pad=pad, ksize=K, zpad=zpad,
        compute_dtype=w_folded.dtype)

    # Explicit scoped-VMEM budget: double-buffered in/out blocks + resident
    # params + headroom for in-kernel temporaries (padded strip, f32 accum).
    blk = bt * W * F
    need = (2 * blk * x.dtype.itemsize                 # input blocks
            + 2 * blk * out_dtype.itemsize             # output blocks
            + 2 * (w_folded.size * w_folded.dtype.itemsize + 4 * F)
            + 8 * blk * 4)                             # temporaries headroom
    vmem_limit = int(min(100 << 20, max(16 << 20, 2 * need)))

    return pl.pallas_call(
        kernel,
        out_shape=jax.ShapeDtypeStruct((B, W, F), out_dtype),
        grid=(B // bt,),
        in_specs=[
            pl.BlockSpec((bt, W, F), lambda i: (i, 0, 0)),
            # Weight/bias are resident across the grid (constant index maps).
            # For very large F on 64 MiB-VMEM chips, pipeline_mode=pl.Buffered(1)
            # on these two specs would additionally halve their footprint.
            pl.BlockSpec((K, F, F), lambda i: (0, 0, 0)),
            pl.BlockSpec((1, F), lambda i: (0, 0)),
        ],
        out_specs=pl.BlockSpec((bt, W, F), lambda i: (i, 0, 0)),
        compiler_params=pltpu.CompilerParams(
            dimension_semantics=("parallel",),
            vmem_limit_bytes=vmem_limit),
    )(x, w_folded, b_folded)


def conv_layer_ref(x, weight, bias, kernel_size=7):
    """Pure-JAX reference mirroring the PyTorch module exactly."""
    pad = (kernel_size - 1) // 2
    xc = jnp.transpose(x, (0, 2, 1))                        # (B, F, W)
    xc = jnp.pad(xc, ((0, 0), (0, 0), (pad, pad)))          # ConstantPad1d
    y = jax.lax.conv_general_dilated(
        xc, weight, window_strides=(1,), padding='VALID',
        dimension_numbers=('NCH', 'OIH', 'NCH'))
    y = jax.nn.relu(y + bias[None, :, None])
    return jnp.transpose(y, (0, 2, 1))                      # (B, W, F)


if __name__ == "__main__":
    B, W, F, K = 2, 16, 4, 7

    key = jax.random.PRNGKey(0)
    kx, kw, kb = jax.random.split(key, 3)

    # Deterministic parameter init (PyTorch-like uniform bound 1/sqrt(fan_in)).
    bound = 1.0 / jnp.sqrt(jnp.float32(F * K))
    weight = jax.random.uniform(kw, (F, F, K), jnp.float32, -bound, bound)
    bias = jax.random.uniform(kb, (F,), jnp.float32, -bound, bound)
    x = jax.random.normal(kx, (B, W, F), jnp.float32)

    # Fold Conv1d parameters ONCE (module-init time), outside the per-call path.
    w_folded, b_folded = fold_conv_params(weight, bias)

    fn = jax.jit(functools.partial(conv_layer_pallas, kernel_size=K))
    out = jax.block_until_ready(fn(x, w_folded, b_folded))

    # Intentional precision choice: MXU operands are bf16 with f32 accumulation,
    # so compare against the reference evaluated on bf16-rounded operands (the
    # remaining difference is accumulation-order noise only).
    ref = conv_layer_ref(x.astype(jnp.bfloat16).astype(jnp.float32),
                         weight.astype(jnp.bfloat16).astype(jnp.float32),
                         bias, kernel_size=K)

    assert out.shape == (B, W, F)
    assert out.dtype == x.dtype
    err = float(jnp.max(jnp.abs(out.astype(jnp.float32) - ref)))
    assert err < 2e-3, f"mismatch vs reference: max abs err {err}"

    print("KERNEL_OK")
</pallas_src>

<mosaic_0001>
module attributes {stable_mosaic.version = 11 : i64} {
  func.func @_conv1d_relu_kernel(%arg0: i32, %arg1: memref<1x16x4xf32, #tpu.memory_space<vmem>>, %arg2: memref<7x4x4xbf16, #tpu.memory_space<vmem>>, %arg3: memref<1x4xf32, #tpu.memory_space<vmem>>, %arg4: memref<1x16x4xf32, #tpu.memory_space<vmem>>) attributes {dimension_semantics = [#tpu.dimension_semantics<parallel>], iteration_bounds = array<i64: 2>, scalar_prefetch = 0 : i64, scratch_operands = 0 : i64, tpu.core_type = #tpu.core_type<tc>, window_params = [{transform_indices = @transform_0, window_bounds = array<i64: 1, 16, 4>}, {pipeline_mode = #tpu.pipeline_mode<synchronous>, transform_indices = @transform_1, window_bounds = array<i64: 7, 4, 4>}, {pipeline_mode = #tpu.pipeline_mode<synchronous>, transform_indices = @transform_2, window_bounds = array<i64: 1, 4>}, {transform_indices = @transform_3, window_bounds = array<i64: 1, 16, 4>}]} {
    %c0 = arith.constant 0 : index
    %c0_0 = arith.constant 0 : index
    %c0_1 = arith.constant 0 : index
    %0 = vector.load %arg1[%c0, %c0_0, %c0_1] : memref<1x16x4xf32, #tpu.memory_space<vmem>>, vector<1x16x4xf32>
    %1 = vector.shape_cast %0 : vector<1x16x4xf32> to vector<16x4xf32>
    %2 = arith.truncf %1 : vector<16x4xf32> to vector<16x4xbf16>
    %cst = arith.constant 0.000000e+00 : bf16
    %3 = vector.broadcast %cst : bf16 to vector<16x4xbf16>
    %4 = tpu.concatenate %3, %2, %3 in 0 : vector<16x4xbf16>, vector<16x4xbf16>, vector<16x4xbf16> -> vector<48x4xbf16>
    %cst_2 = arith.constant 0.000000e+00 : f32
    %5 = vector.broadcast %cst_2 : f32 to vector<16x4xf32>
    %6 = vector.extract_strided_slice %4 {offsets = [13, 0], sizes = [16, 4], strides = [1, 1]} : vector<48x4xbf16> to vector<16x4xbf16>
    %c0_3 = arith.constant 0 : index
    %c0_4 = arith.constant 0 : index
    %c0_5 = arith.constant 0 : index
    %7 = vector.load %arg2[%c0_3, %c0_4, %c0_5] : memref<7x4x4xbf16, #tpu.memory_space<vmem>>, vector<1x4x4xbf16>
    %8 = vector.shape_cast %7 : vector<1x4x4xbf16> to vector<4x4xbf16>
    %cst_6 = arith.constant dense<0.000000e+00> : vector<16x4xf32>
    %9 = tpu.matmul %6, %8, %cst_6 {dimension_numbers = #tpu.dot_dimension_numbers<[1], [0], [0], [1], [0, 0, 1, 1], [], []>} : vector<16x4xbf16>, vector<4x4xbf16>, vector<16x4xf32> -> vector<16x4xf32>
    %10 = arith.addf %5, %9 : vector<16x4xf32>
    %11 = vector.extract_strided_slice %4 {offsets = [14, 0], sizes = [16, 4], strides = [1, 1]} : vector<48x4xbf16> to vector<16x4xbf16>
    %c1 = arith.constant 1 : index
    %c0_7 = arith.constant 0 : index
    %c0_8 = arith.constant 0 : index
    %12 = vector.load %arg2[%c1, %c0_7, %c0_8] : memref<7x4x4xbf16, #tpu.memory_space<vmem>>, vector<1x4x4xbf16>
    %13 = vector.shape_cast %12 : vector<1x4x4xbf16> to vector<4x4xbf16>
    %cst_9 = arith.constant dense<0.000000e+00> : vector<16x4xf32>
    %14 = tpu.matmul %11, %13, %cst_9 {dimension_numbers = #tpu.dot_dimension_numbers<[1], [0], [0], [1], [0, 0, 1, 1], [], []>} : vector<16x4xbf16>, vector<4x4xbf16>, vector<16x4xf32> -> vector<16x4xf32>
    %15 = arith.addf %10, %14 : vector<16x4xf32>
    %16 = vector.extract_strided_slice %4 {offsets = [15, 0], sizes = [16, 4], strides = [1, 1]} : vector<48x4xbf16> to vector<16x4xbf16>
    %c2 = arith.constant 2 : index
    %c0_10 = arith.constant 0 : index
    %c0_11 = arith.constant 0 : index
    %17 = vector.load %arg2[%c2, %c0_10, %c0_11] : memref<7x4x4xbf16, #tpu.memory_space<vmem>>, vector<1x4x4xbf16>
    %18 = vector.shape_cast %17 : vector<1x4x4xbf16> to vector<4x4xbf16>
    %cst_12 = arith.constant dense<0.000000e+00> : vector<16x4xf32>
    %19 = tpu.matmul %16, %18, %cst_12 {dimension_numbers = #tpu.dot_dimension_numbers<[1], [0], [0], [1], [0, 0, 1, 1], [], []>} : vector<16x4xbf16>, vector<4x4xbf16>, vector<16x4xf32> -> vector<16x4xf32>
    %20 = arith.addf %15, %19 : vector<16x4xf32>
    %21 = vector.extract_strided_slice %4 {offsets = [16, 0], sizes = [16, 4], strides = [1, 1]} : vector<48x4xbf16> to vector<16x4xbf16>
    %c3 = arith.constant 3 : index
    %c0_13 = arith.constant 0 : index
    %c0_14 = arith.constant 0 : index
    %22 = vector.load %arg2[%c3, %c0_13, %c0_14] : memref<7x4x4xbf16, #tpu.memory_space<vmem>>, vector<1x4x4xbf16>
    %23 = vector.shape_cast %22 : vector<1x4x4xbf16> to vector<4x4xbf16>
    %cst_15 = arith.constant dense<0.000000e+00> : vector<16x4xf32>
    %24 = tpu.matmul %21, %23, %cst_15 {dimension_numbers = #tpu.dot_dimension_numbers<[1], [0], [0], [1], [0, 0, 1, 1], [], []>} : vector<16x4xbf16>, vector<4x4xbf16>, vector<16x4xf32> -> vector<16x4xf32>
    %25 = arith.addf %20, %24 : vector<16x4xf32>
    %26 = vector.extract_strided_slice %4 {offsets = [17, 0], sizes = [16, 4], strides = [1, 1]} : vector<48x4xbf16> to vector<16x4xbf16>
    %c4 = arith.constant 4 : index
    %c0_16 = arith.constant 0 : index
    %c0_17 = arith.constant 0 : index
    %27 = vector.load %arg2[%c4, %c0_16, %c0_17] : memref<7x4x4xbf16, #tpu.memory_space<vmem>>, vector<1x4x4xbf16>
    %28 = vector.shape_cast %27 : vector<1x4x4xbf16> to vector<4x4xbf16>
    %cst_18 = arith.constant dense<0.000000e+00> : vector<16x4xf32>
    %29 = tpu.matmul %26, %28, %cst_18 {dimension_numbers = #tpu.dot_dimension_numbers<[1], [0], [0], [1], [0, 0, 1, 1], [], []>} : vector<16x4xbf16>, vector<4x4xbf16>, vector<16x4xf32> -> vector<16x4xf32>
    %30 = arith.addf %25, %29 : vector<16x4xf32>
    %31 = vector.extract_strided_slice %4 {offsets = [18, 0], sizes = [16, 4], strides = [1, 1]} : vector<48x4xbf16> to vector<16x4xbf16>
    %c5 = arith.constant 5 : index
    %c0_19 = arith.constant 0 : index
    %c0_20 = arith.constant 0 : index
    %32 = vector.load %arg2[%c5, %c0_19, %c0_20] : memref<7x4x4xbf16, #tpu.memory_space<vmem>>, vector<1x4x4xbf16>
    %33 = vector.shape_cast %32 : vector<1x4x4xbf16> to vector<4x4xbf16>
    %cst_21 = arith.constant dense<0.000000e+00> : vector<16x4xf32>
    %34 = tpu.matmul %31, %33, %cst_21 {dimension_numbers = #tpu.dot_dimension_numbers<[1], [0], [0], [1], [0, 0, 1, 1], [], []>} : vector<16x4xbf16>, vector<4x4xbf16>, vector<16x4xf32> -> vector<16x4xf32>
    %35 = arith.addf %30, %34 : vector<16x4xf32>
    %36 = vector.extract_strided_slice %4 {offsets = [19, 0], sizes = [16, 4], strides = [1, 1]} : vector<48x4xbf16> to vector<16x4xbf16>
    %c6 = arith.constant 6 : index
    %c0_22 = arith.constant 0 : index
    %c0_23 = arith.constant 0 : index
    %37 = vector.load %arg2[%c6, %c0_22, %c0_23] : memref<7x4x4xbf16, #tpu.memory_space<vmem>>, vector<1x4x4xbf16>
    %38 = vector.shape_cast %37 : vector<1x4x4xbf16> to vector<4x4xbf16>
    %cst_24 = arith.constant dense<0.000000e+00> : vector<16x4xf32>
    %39 = tpu.matmul %36, %38, %cst_24 {dimension_numbers = #tpu.dot_dimension_numbers<[1], [0], [0], [1], [0, 0, 1, 1], [], []>} : vector<16x4xbf16>, vector<4x4xbf16>, vector<16x4xf32> -> vector<16x4xf32>
    %40 = arith.addf %35, %39 : vector<16x4xf32>
    %c0_25 = arith.constant 0 : index
    %c0_26 = arith.constant 0 : index
    %41 = vector.load %arg3[%c0_25, %c0_26] : memref<1x4xf32, #tpu.memory_space<vmem>>, vector<1x4xf32>
    %42 = vector.broadcast %41 : vector<1x4xf32> to vector<16x4xf32>
    %43 = arith.addf %40, %42 : vector<16x4xf32>
    %cst_27 = arith.constant 0.000000e+00 : f32
    %44 = vector.broadcast %cst_27 : f32 to vector<16x4xf32>
    %45 = arith.maximumf %43, %44 : vector<16x4xf32>
    %c0_28 = arith.constant 0 : index
    %c0_29 = arith.constant 0 : index
    %c0_30 = arith.constant 0 : index
    %46 = vector.load %arg4[%c0_28, %c0_29, %c0_30] : memref<1x16x4xf32, #tpu.memory_space<vmem>>, vector<1x16x4xf32>
    %47 = vector.shape_cast %46 : vector<1x16x4xf32> to vector<16x4xf32>
    %48 = vector.shape_cast %45 : vector<16x4xf32> to vector<1x16x4xf32>
    tpu.vector_store %arg4[%c0_28, %c0_29, %c0_30], %48 {strides = array<i32>} : memref<1x16x4xf32, #tpu.memory_space<vmem>>, vector<1x16x4xf32>,
    return
  }
  func.func @transform_0(%arg0: i32) -> (i32, i32, i32) {
    %c0_i32 = arith.constant 0 : i32
    %c0_i32_0 = arith.constant 0 : i32
    %c0_i32_1 = arith.constant 0 : i32
    return %arg0, %c0_i32, %c0_i32_0 : i32, i32, i32
  }
  func.func @transform_1(%arg0: i32) -> (i32, i32, i32) {
    %c0_i32 = arith.constant 0 : i32
    %c0_i32_0 = arith.constant 0 : i32
    %c0_i32_1 = arith.constant 0 : i32
    %c0_i32_2 = arith.constant 0 : i32
    return %c0_i32, %c0_i32_0, %c0_i32_1 : i32, i32, i32
  }
  func.func @transform_2(%arg0: i32) -> (i32, i32) {
    %c0_i32 = arith.constant 0 : i32
    %c0_i32_0 = arith.constant 0 : i32
    %c0_i32_1 = arith.constant 0 : i32
    return %c0_i32, %c0_i32_0 : i32, i32
  }
  func.func @transform_3(%arg0: i32) -> (i32, i32, i32) {
    %c0_i32 = arith.constant 0 : i32
    %c0_i32_0 = arith.constant 0 : i32
    %c0_i32_1 = arith.constant 0 : i32
    return %arg0, %c0_i32, %c0_i32_0 : i32, i32, i32
  }
}

</mosaic_0001>

<llo_original>
// kernel: conv_layer_pallas.1
$region0: #{conv_layer_pallas.1}
  #allocation0 [shape = 'u32[]', space=smem, size = 0x4, offset = 0x4, fixed_abs, tag = 'smem constant byte address 0x4 - core index']
  #allocation1 [shape = 'u32[144,128]{1,0:T(1,128)}', space=vmem, size = 0x12000, scoped, tag = 'internal scratch']
  %s0 = inlined_call_operand.vmem [shape: f32[2,16,4], index: 0, kind: input, shape index: {}]
  %s1 = inlined_call_operand.vmem [shape: bf16[7,4,4], index: 1, kind: input, shape index: {}]
  %s2 = inlined_call_operand.vmem [shape: f32[1,4], index: 2, kind: input, shape index: {}]
  %s3 = inlined_call_operand.vmem [shape: f32[2,16,4], index: 3, kind: output, shape index: {}]
  %s4 = sld [smem:[#allocation0]]
  $region45: #{conv_layer_pallas.1} parent=0
    _
  %s6 = ssub.s32 1, %s4
  %s7 = scalar_select 0, %s6, %s4
  loop: start=0, step=1, limit=4
  $region2: #{conv_layer_pallas.1} parent=0 // loop_pre_header
    _
  $region3: #{conv_layer_pallas.1} parent=0 // loop_header
    %s9 = sphi 0, %s13
    %p10 = scmp.ge.s32.totalorder %s9, 4
    %s19 = sphi 0, %s21
    %s22 = sphi 0, %s19
    %s23 = sphi 0, %s22
    %s39 = sphi 0, %s23
    %s43 = sphi 0, %s43
    %s45 = sphi 0, %s43
    %s46 = sphi 0, %s45
    %s60 = sphi 0, %s46
    %s64 = sphi 0, %s64
    %s66 = sphi 0, %s64
    %s67 = sphi 0, %s66
    %s81 = sphi 0, %s67
    %s87 = sphi 0, %s89
    %s90 = sphi 0, %s87
    %s91 = sphi 0, %s90
    %s107 = sphi 0, %s91
  $region4: #{conv_layer_pallas.1} parent=0 // loop_header_branch
    %12 = sbr.rel (%p10) target = $region8
  $region5: #{conv_layer_pallas.1} parent=0 // loop_body
    %s14 = ssub.s32 %s9, 1
    %s15 = ssub.s32 %s9, 2
    %s16 = sadd.s32 %s9, 1
    %s17 = ssub.s32 %s9, %s16
    %p18 = scmp.eq.s32.totalorder %s17, 0
    %s20 = sadd.s32 %s19, 1
    %s21 = scalar_select %p18, %s19, %s20
    %p24 = pneg %p18
    %p25 = scmp.eq.s32.totalorder %s9, 1
    %p26 = por %p24, %p25
    %p27 = scmp.ne.s32.totalorder %s19, %s22
    %p28 = scmp.eq.s32.totalorder %s9, 0
    %p29 = por %p27, %p28
    %p30 = scmp.ne.s32.totalorder %s19, %s22
    %p31 = scmp.eq.s32.totalorder %s14, 1
    %p32 = por %p30, %p31
    %p33 = scmp.ne.s32.totalorder %s22, %s23
    %p34 = scmp.eq.s32.totalorder %s14, 0
    %p35 = por %p33, %p34
    %p36 = scmp.ne.s32.totalorder %s22, %s23
    %p37 = scmp.eq.s32.totalorder %s15, 1
    %p38 = por %p36, %p37
    %p40 = scmp.ne.s32.totalorder %s23, %s39
    %p41 = scmp.eq.s32.totalorder %s15, 0
    %p42 = por %p40, %p41
    %s44 = sadd.s32 %s43, 1
    %p47 = scmp.eq.s32.totalorder %s9, 1
    %p48 = scmp.ne.s32.totalorder %s43, %s45
    %p49 = scmp.eq.s32.totalorder %s9, 0
    %p50 = por %p48, %p49
    %p51 = scmp.ne.s32.totalorder %s43, %s45
    %p52 = scmp.eq.s32.totalorder %s14, 1
    %p53 = por %p51, %p52
    %p54 = scmp.ne.s32.totalorder %s45, %s46
    %p55 = scmp.eq.s32.totalorder %s14, 0
    %p56 = por %p54, %p55
    %p57 = scmp.ne.s32.totalorder %s45, %s46
    %p58 = scmp.eq.s32.totalorder %s15, 1
    %p59 = por %p57, %p58
    %p61 = scmp.ne.s32.totalorder %s46, %s60
    %p62 = scmp.eq.s32.totalorder %s15, 0
    %p63 = por %p61, %p62
    %s65 = sadd.s32 %s64, 1
    %p68 = scmp.eq.s32.totalorder %s9, 1
    %p69 = scmp.ne.s32.totalorder %s64, %s66
    %p70 = scmp.eq.s32.totalorder %s9, 0
    %p71 = por %p69, %p70
    %p72 = scmp.ne.s32.totalorder %s64, %s66
    %p73 = scmp.eq.s32.totalorder %s14, 1
    %p74 = por %p72, %p73
    %p75 = scmp.ne.s32.totalorder %s66, %s67
    %p76 = scmp.eq.s32.totalorder %s14, 0
    %p77 = por %p75, %p76
    %p78 = scmp.ne.s32.totalorder %s66, %s67
    %p79 = scmp.eq.s32.totalorder %s15, 1
    %p80 = por %p78, %p79
    %p82 = scmp.ne.s32.totalorder %s67, %s81
    %p83 = scmp.eq.s32.totalorder %s15, 0
    %p84 = por %p82, %p83
    %s85 = ssub.s32 %s9, %s16
    %p86 = scmp.eq.s32.totalorder %s85, 0
    %s88 = sadd.s32 %s87, 1
    %s89 = scalar_select %p86, %s87, %s88
    %p92 = pneg %p86
    %p93 = scmp.eq.s32.totalorder %s9, 1
    %p94 = por %p92, %p93
    %p95 = scmp.ne.s32.totalorder %s87, %s90
    %p96 = scmp.eq.s32.totalorder %s9, 0
    %p97 = por %p95, %p96
    %p98 = scmp.ne.s32.totalorder %s87, %s90
    %p99 = scmp.eq.s32.totalorder %s14, 1
    %p100 = por %p98, %p99
    %p101 = scmp.ne.s32.totalorder %s90, %s91
    %p102 = scmp.eq.s32.totalorder %s14, 0
    %p103 = por %p101, %p102
    %p104 = scmp.ne.s32.totalorder %s90, %s91
    %p105 = scmp.eq.s32.totalorder %s15, 1
    %p106 = por %p104, %p105
    %p108 = scmp.ne.s32.totalorder %s91, %s107
    %p109 = scmp.eq.s32.totalorder %s15, 0
    %p110 = por %p108, %p109
    %p111 = scmp.le.s32.totalorder 1, %s9
    %p112 = scmp.lt.s32.totalorder %s9, 3
    %p113 = pnand %p111, %p112
    %p114 = pneg %p113
    // Predicated region
    $region9: #{conv_layer_pallas.1} parent=5 // pred_check
      _
    $region10: #{conv_layer_pallas.1} parent=5 // pred_check_branch
      %116 = sbr.rel (%p113) target = $region12
    $region11: #{conv_layer_pallas.1} parent=5 // pred_region
      %s117 = ssub.s32 %s9, 1
      // Predicated region
      $region13: #{conv_layer_pallas.1} parent=11 // pred_check
        %p118 = pneg %p56
      $region14: #{conv_layer_pallas.1} parent=11 // pred_check_branch
        %120 = sbr.rel (%p118) target = $region16
      $region15: #{conv_layer_pallas.1} parent=11 // pred_region
        _
      $region16: #{conv_layer_pallas.1} parent=11 // pred_fallthru
        _
      // Predicated region
      $region17: #{conv_layer_pallas.1} parent=11 // pred_check
        %p121 = pneg %p77
      $region18: #{conv_layer_pallas.1} parent=11 // pred_check_branch
        %123 = sbr.rel (%p121) target = $region20
      $region19: #{conv_layer_pallas.1} parent=11 // pred_region
        _
      $region20: #{conv_layer_pallas.1} parent=11 // pred_fallthru
        _
    $region12: #{conv_layer_pallas.1} parent=5 // pred_fallthru
      _
    %p124 = scmp.lt.s32.totalorder %s9, 2
    // Predicated region
    $region21: #{conv_layer_pallas.1} parent=5 // pred_check
      %p125 = pneg %p124
    $region22: #{conv_layer_pallas.1} parent=5 // pred_check_branch
      %127 = sbr.rel (%p125) target = $region24
    $region23: #{conv_layer_pallas.1} parent=5 // pred_region
      // Predicated region
      $region25: #{conv_layer_pallas.1} parent=23 // pred_check
        %p128 = pneg %p29
      $region26: #{conv_layer_pallas.1} parent=23 // pred_check_branch
        %130 = sbr.rel (%p128) target = $region28
      $region27: #{conv_layer_pallas.1} parent=23 // pred_region
        %p131 = scmp.lt.s32.totalorder %s9, 1
        %s132 = scalar_select %p131, %s9, 1
        %s133 = smul.addr %s132, 2
        %s134 = smul.addr %s133, 8
        %s135 = scalar_lea.vmem %s0, %s134
      $region28: #{conv_layer_pallas.1} parent=23 // pred_fallthru
        _
    $region24: #{conv_layer_pallas.1} parent=5 // pred_fallthru
      _
    %p136 = scmp.le.s32.totalorder 1, %s9
    %p137 = scmp.lt.s32.totalorder %s9, 3
    %p138 = pnand %p136, %p137
    %p139 = pneg %p138
    // Predicated region
    $region29: #{conv_layer_pallas.1} parent=5 // pred_check
      _
    $region30: #{conv_layer_pallas.1} parent=5 // pred_check_branch
      %141 = sbr.rel (%p138) target = $region32
    $region31: #{conv_layer_pallas.1} parent=5 // pred_region
      %s142 = ssub.s32 %s9, 1
      %p143 = scmp.lt.s32.totalorder %s14, 1
      %s144 = scalar_select %p143, %s14, 1
      %s145 = smul.addr %s144, 2
      %s146 = smul.addr %s145, 8
      %s147 = scalar_lea.vmem %s0, %s146
      %p148 = pneg %p35
      %p149 = pneg %p32
      %p150 = pneg %p56
      %p151 = pneg %p53
      %p152 = pneg %p77
      %p153 = pneg %p74
      %p154 = pneg %p103
      %p155 = pneg %p100
      %p156 = scmp.lt.s32.totalorder %s14, 1
      %s157 = scalar_select %p156, %s14, 1
      %s158 = smul.addr %s157, 2
      %s159 = smul.addr %s158, 8
      %s160 = scalar_lea.vmem %s3, %s159
      %p161 = scmp.lt.s32.totalorder %s14, 1
      %s162 = scalar_select %p161, %s14, 1
      %s163 = smul.addr %s162, 2
      %s164 = smul.addr %s163, 8
      %s165 = scalar_lea.vmem %s0, %s164
      %p166 = scmp.lt.s32.totalorder %s14, 1
      %s167 = scalar_select %p166, %s14, 1
      %s168 = smul.addr %s167, 2
      %s169 = smul.addr %s168, 8
      %s170 = scalar_lea.vmem %s3, %s169
      %v172 = vld [vmem:[%s165] sm:$0xff]
      %v173 = vld [vmem:[%s165 + $0x8] sm:$0xff]
      %v174 = vpack.c.bf16 %v173, %v172
      %v175 = vld [vmem:[%s1] sm:$0x3]
      %s176 = scalar_lea.vmem %s1, 2
      %v177 = vld [vmem:[%s176] sm:$0x3]
      %vm180 = vcmask 1040384
      %v181 = vrot.slane 0, 7
      %v182 = vrot.slane %v174, 7
      %v183 = vsel %vm180, %v181, %v182
      %vm184 = vcmask 31744
      %v186 = vsel %vm184, %v183, 0
      %vm188 = vcmask 1041408
      %v190 = vsel %vm188, %v177, 0
      %192 = vmatprep.subr.bf16.mxu0 0
      %193 = vmatpush1.bf16.msra.mxu0 %v190
      %194 = vmatprep.subr.bf16.mxu0 0
      %195 = vmatpush1.bf16.msra.mxu0 0
      %196 = vmatprep.subr.bf16.mxu0 0
      %197 = vmatpush1.bf16.msra.mxu0 0
      %198 = vmatprep.subr.bf16.mxu0 0
      %199 = vmatpush1.bf16.msra.mxu0 0
      %200 = vmatprep.subr.bf16.mxu0 0
      %201 = vmatpush1.bf16.msra.mxu0 0
      %202 = vmatprep.subr.bf16.mxu0 0
      %203 = vmatpush1.bf16.msra.mxu0 0
      %204 = vmatprep.subr.bf16.mxu0 0
      %205 = vmatpush1.bf16.msra.mxu0 0
      %206 = vmatprep.subr.bf16.mxu0 0
      %207 = vmatpush1.bf16.msra.mxu0 0
      %208 = vmatprep.subr.bf16.mxu0 0
      %209 = vmatpush1.bf16.msra.mxu0 0
      %210 = vmatprep.subr.bf16.mxu0 0
      %211 = vmatpush1.bf16.msra.mxu0 0
      %212 = vmatprep.subr.bf16.mxu0 0
      %213 = vmatpush1.bf16.msra.mxu0 0
      %214 = vmatprep.subr.bf16.mxu0 0
      %215 = vmatpush1.bf16.msra.mxu0 0
      %216 = vmatprep.subr.bf16.mxu0 0
      %217 = vmatpush1.bf16.msra.mxu0 0
      %218 = vmatprep.subr.bf16.mxu0 0
      %219 = vmatpush1.bf16.msra.mxu0 0
      %220 = vmatprep.subr.bf16.mxu0 0
      %221 = vmatpush1.bf16.msra.mxu0 0
      %222 = vmatprep.subr.bf16.mxu0 0
      %223 = vmatpush1.bf16.msra.mxu0 0
      %224 = vmatprep.mubr.bf16.mxu0 0
      %225 = vmatmul.mubr.bf16.gmra.mrb[0].mxu0 %v186
      %v226 = vpop.f32.mrb[0].mxu0
      %v227 = vadd.f32 0.0, %v226
      %v228 = vpop.f32.mrb[0].mxu0
      %v229 = vpop.f32.mrb[0].mxu0
      %v230 = vadd.f32 0.0, %v229
      %v231 = vpop.f32.mrb[0].mxu0
      %232 = vdwg.mxu0
      %vm233 = vsmask.f32 1280
      %v235 = vshrl.u32 0, 16
      %v237 = vrot.slane %v235, 6
      %v238 = vshll.u32 0, 16
      %v240 = vrot.slane %v238, 7
      %v241 = vor.u32 %v237, %v240
      %v243 = vshrl.u32 %v174, 16
      %v245 = vrot.slane %v243, 6
      %v246 = vshll.u32 %v174, 16
      %v248 = vrot.slane %v246, 7
      %v249 = vor.u32 %v245, %v248
      %v250 = vsel %vm233, %v241, %v249
      %v252 = vsel %vm184, %v250, 0
      %v255 = vsel %vm188, %v175, 0
      %257 = vmatprep.subr.bf16.mxu0 0
      %258 = vmatpush1.bf16.msra.mxu0 %v255
      %259 = vmatprep.subr.bf16.mxu0 0
      %260 = vmatpush1.bf16.msra.mxu0 0
      %261 = vmatprep.subr.bf16.mxu0 0
      %262 = vmatpush1.bf16.msra.mxu0 0
      %263 = vmatprep.subr.bf16.mxu0 0
      %264 = vmatpush1.bf16.msra.mxu0 0
      %265 = vmatprep.subr.bf16.mxu0 0
      %266 = vmatpush1.bf16.msra.mxu0 0
      %267 = vmatprep.subr.bf16.mxu0 0
      %268 = vmatpush1.bf16.msra.mxu0 0
      %269 = vmatprep.subr.bf16.mxu0 0
      %270 = vmatpush1.bf16.msra.mxu0 0
      %271 = vmatprep.subr.bf16.mxu0 0
      %272 = vmatpush1.bf16.msra.mxu0 0
      %273 = vmatprep.subr.bf16.mxu0 0
      %274 = vmatpush1.bf16.msra.mxu0 0
      %275 = vmatprep.subr.bf16.mxu0 0
      %276 = vmatpush1.bf16.msra.mxu0 0
      %277 = vmatprep.subr.bf16.mxu0 0
      %278 = vmatpush1.bf16.msra.mxu0 0
      %279 = vmatprep.subr.bf16.mxu0 0
      %280 = vmatpush1.bf16.msra.mxu0 0
      %281 = vmatprep.subr.bf16.mxu0 0
      %282 = vmatpush1.bf16.msra.mxu0 0
      %283 = vmatprep.subr.bf16.mxu0 0
      %284 = vmatpush1.bf16.msra.mxu0 0
      %285 = vmatprep.subr.bf16.mxu0 0
      %286 = vmatpush1.bf16.msra.mxu0 0
      %287 = vmatprep.subr.bf16.mxu0 0
      %288 = vmatpush1.bf16.msra.mxu0 0
      %289 = vmatprep.mubr.bf16.mxu0 0
      %290 = vmatmul.mubr.bf16.gmra.mrb[0].mxu0 %v252
      %v291 = vpop.f32.mrb[0].mxu0
      %v292 = vadd.f32 %v227, %v291
      %v293 = vpop.f32.mrb[0].mxu0
      %v294 = vpop.f32.mrb[0].mxu0
      %v295 = vadd.f32 %v230, %v294
      %v296 = vpop.f32.mrb[0].mxu0
      %297 = vdwg.mxu0
      %s298 = scalar_lea.vmem %s1, 4
      %v299 = vld [vmem:[%s298] sm:$0x3]
      %vm300 = vsmask.f32 256
      %v301 = vrot.slane %v235, 7
      %v302 = vrot.slane %v243, 7
      %v303 = vor.u32 %v302, %v246
      %v304 = vsel %vm300, %v301, %v303
      %v306 = vsel %vm184, %v304, 0
      %v309 = vsel %vm188, %v299, 0
      %311 = vmatprep.subr.bf16.mxu0 0
      %312 = vmatpush1.bf16.msra.mxu0 %v309
      %313 = vmatprep.subr.bf16.mxu0 0
      %314 = vmatpush1.bf16.msra.mxu0 0
      %315 = vmatprep.subr.bf16.mxu0 0
      %316 = vmatpush1.bf16.msra.mxu0 0
      %317 = vmatprep.subr.bf16.mxu0 0
      %318 = vmatpush1.bf16.msra.mxu0 0
      %319 = vmatprep.subr.bf16.mxu0 0
      %320 = vmatpush1.bf16.msra.mxu0 0
      %321 = vmatprep.subr.bf16.mxu0 0
      %322 = vmatpush1.bf16.msra.mxu0 0
      %323 = vmatprep.subr.bf16.mxu0 0
      %324 = vmatpush1.bf16.msra.mxu0 0
      %325 = vmatprep.subr.bf16.mxu0 0
      %326 = vmatpush1.bf16.msra.mxu0 0
      %327 = vmatprep.subr.bf16.mxu0 0
      %328 = vmatpush1.bf16.msra.mxu0 0
      %329 = vmatprep.subr.bf16.mxu0 0
      %330 = vmatpush1.bf16.msra.mxu0 0
      %331 = vmatprep.subr.bf16.mxu0 0
      %332 = vmatpush1.bf16.msra.mxu0 0
      %333 = vmatprep.subr.bf16.mxu0 0
      %334 = vmatpush1.bf16.msra.mxu0 0
      %335 = vmatprep.subr.bf16.mxu0 0
      %336 = vmatpush1.bf16.msra.mxu0 0
      %337 = vmatprep.subr.bf16.mxu0 0
      %338 = vmatpush1.bf16.msra.mxu0 0
      %339 = vmatprep.subr.bf16.mxu0 0
      %340 = vmatpush1.bf16.msra.mxu0 0
      %341 = vmatprep.subr.bf16.mxu0 0
      %342 = vmatpush1.bf16.msra.mxu0 0
      %343 = vmatprep.mubr.bf16.mxu0 0
      %344 = vmatmul.mubr.bf16.gmra.mrb[0].mxu0 %v306
      %v345 = vpop.f32.mrb[0].mxu0
      %v346 = vadd.f32 0.0, %v345
      %v347 = vpop.f32.mrb[0].mxu0
      %v348 = vpop.f32.mrb[0].mxu0
      %v349 = vadd.f32 0.0, %v348
      %v350 = vpop.f32.mrb[0].mxu0
      %351 = vdwg.mxu0
      %v352 = vadd.f32 %v292, %v346
      %v353 = vadd.f32 %v295, %v349
      %s354 = scalar_lea.vmem %s1, 6
      %v355 = vld [vmem:[%s354] sm:$0x3]
      %v356 = vsel %vm184, %v174, 0
      %v359 = vsel %vm188, %v355, 0
      %361 = vmatprep.subr.bf16.mxu0 0
      %362 = vmatpush1.bf16.msra.mxu0 %v359
      %363 = vmatprep.subr.bf16.mxu0 0
      %364 = vmatpush1.bf16.msra.mxu0 0
      %365 = vmatprep.subr.bf16.mxu0 0
      %366 = vmatpush1.bf16.msra.mxu0 0
      %367 = vmatprep.subr.bf16.mxu0 0
      %368 = vmatpush1.bf16.msra.mxu0 0
      %369 = vmatprep.subr.bf16.mxu0 0
      %370 = vmatpush1.bf16.msra.mxu0 0
      %371 = vmatprep.subr.bf16.mxu0 0
      %372 = vmatpush1.bf16.msra.mxu0 0
      %373 = vmatprep.subr.bf16.mxu0 0
      %374 = vmatpush1.bf16.msra.mxu0 0
      %375 = vmatprep.subr.bf16.mxu0 0
      %376 = vmatpush1.bf16.msra.mxu0 0
      %377 = vmatprep.subr.bf16.mxu0 0
      %378 = vmatpush1.bf16.msra.mxu0 0
      %379 = vmatprep.subr.bf16.mxu0 0
      %380 = vmatpush1.bf16.msra.mxu0 0
      %381 = vmatprep.subr.bf16.mxu0 0
      %382 = vmatpush1.bf16.msra.mxu0 0
      %383 = vmatprep.subr.bf16.mxu0 0
      %384 = vmatpush1.bf16.msra.mxu0 0
      %385 = vmatprep.subr.bf16.mxu0 0
      %386 = vmatpush1.bf16.msra.mxu0 0
      %387 = vmatprep.subr.bf16.mxu0 0
      %388 = vmatpush1.bf16.msra.mxu0 0
      %389 = vmatprep.subr.bf16.mxu0 0
      %390 = vmatpush1.bf16.msra.mxu0 0
      %391 = vmatprep.subr.bf16.mxu0 0
      %392 = vmatpush1.bf16.msra.mxu0 0
      %393 = vmatprep.mubr.bf16.mxu0 0
      %394 = vmatmul.mubr.bf16.gmra.mrb[0].mxu0 %v356
      %v395 = vpop.f32.mrb[0].mxu0
      %v396 = vadd.f32 0.0, %v395
      %v397 = vpop.f32.mrb[0].mxu0
      %v398 = vpop.f32.mrb[0].mxu0
      %v399 = vadd.f32 0.0, %v398
      %v400 = vpop.f32.mrb[0].mxu0
      %401 = vdwg.mxu0
      %v402 = vadd.f32 %v352, %v396
      %v403 = vadd.f32 %v353, %v399
      %s404 = scalar_lea.vmem %s1, 8
      %v405 = vld [vmem:[%s404] sm:$0x3]
      %vm406 = vsmask.f32 7424
      %v407 = vrot.slane %v246, 1
      %v408 = vor.u32 %v243, %v407
      %v409 = vrot.slane %v238, 1
      %v410 = vsel %vm406, %v408, %v409
      %v412 = vsel %vm184, %v410, 0
      %v415 = vsel %vm188, %v405, 0
      %417 = vmatprep.subr.bf16.mxu0 0
      %418 = vmatpush1.bf16.msra.mxu0 %v415
      %419 = vmatprep.subr.bf16.mxu0 0
      %420 = vmatpush1.bf16.msra.mxu0 0
      %421 = vmatprep.subr.bf16.mxu0 0
      %422 = vmatpush1.bf16.msra.mxu0 0
      %423 = vmatprep.subr.bf16.mxu0 0
      %424 = vmatpush1.bf16.msra.mxu0 0
      %425 = vmatprep.subr.bf16.mxu0 0
      %426 = vmatpush1.bf16.msra.mxu0 0
      %427 = vmatprep.subr.bf16.mxu0 0
      %428 = vmatpush1.bf16.msra.mxu0 0
      %429 = vmatprep.subr.bf16.mxu0 0
      %430 = vmatpush1.bf16.msra.mxu0 0
      %431 = vmatprep.subr.bf16.mxu0 0
      %432 = vmatpush1.bf16.msra.mxu0 0
      %433 = vmatprep.subr.bf16.mxu0 0
      %434 = vmatpush1.bf16.msra.mxu0 0
      %435 = vmatprep.subr.bf16.mxu0 0
      %436 = vmatpush1.bf16.msra.mxu0 0
      %437 = vmatprep.subr.bf16.mxu0 0
      %438 = vmatpush1.bf16.msra.mxu0 0
      %439 = vmatprep.subr.bf16.mxu0 0
      %440 = vmatpush1.bf16.msra.mxu0 0
      %441 = vmatprep.subr.bf16.mxu0 0
      %442 = vmatpush1.bf16.msra.mxu0 0
      %443 = vmatprep.subr.bf16.mxu0 0
      %444 = vmatpush1.bf16.msra.mxu0 0
      %445 = vmatprep.subr.bf16.mxu0 0
      %446 = vmatpush1.bf16.msra.mxu0 0
      %447 = vmatprep.subr.bf16.mxu0 0
      %448 = vmatpush1.bf16.msra.mxu0 0
      %449 = vmatprep.mubr.bf16.mxu0 0
      %450 = vmatmul.mubr.bf16.gmra.mrb[0].mxu0 %v412
      %v451 = vpop.f32.mrb[0].mxu0
      %v452 = vadd.f32 0.0, %v451
      %v453 = vpop.f32.mrb[0].mxu0
      %v454 = vpop.f32.mrb[0].mxu0
      %v455 = vadd.f32 0.0, %v454
      %v456 = vpop.f32.mrb[0].mxu0
      %457 = vdwg.mxu0
      %v458 = vadd.f32 %v402, %v452
      %v459 = vadd.f32 %v403, %v455
      %s460 = scalar_lea.vmem %s1, 10
      %v461 = vld [vmem:[%s460] sm:$0x3]
      %vm462 = vcmask 1046528
      %v463 = vrot.slane %v174, 1
      %v464 = vrot.slane 0, 1
      %v465 = vsel %vm462, %v463, %v464
      %v467 = vsel %vm184, %v465, 0
      %v470 = vsel %vm188, %v461, 0
      %472 = vmatprep.subr.bf16.mxu0 0
      %473 = vmatpush1.bf16.msra.mxu0 %v470
      %474 = vmatprep.subr.bf16.mxu0 0
      %475 = vmatpush1.bf16.msra.mxu0 0
      %476 = vmatprep.subr.bf16.mxu0 0
      %477 = vmatpush1.bf16.msra.mxu0 0
      %478 = vmatprep.subr.bf16.mxu0 0
      %479 = vmatpush1.bf16.msra.mxu0 0
      %480 = vmatprep.subr.bf16.mxu0 0
      %481 = vmatpush1.bf16.msra.mxu0 0
      %482 = vmatprep.subr.bf16.mxu0 0
      %483 = vmatpush1.bf16.msra.mxu0 0
      %484 = vmatprep.subr.bf16.mxu0 0
      %485 = vmatpush1.bf16.msra.mxu0 0
      %486 = vmatprep.subr.bf16.mxu0 0
      %487 = vmatpush1.bf16.msra.mxu0 0
      %488 = vmatprep.subr.bf16.mxu0 0
      %489 = vmatpush1.bf16.msra.mxu0 0
      %490 = vmatprep.subr.bf16.mxu0 0
      %491 = vmatpush1.bf16.msra.mxu0 0
      %492 = vmatprep.subr.bf16.mxu0 0
      %493 = vmatpush1.bf16.msra.mxu0 0
      %494 = vmatprep.subr.bf16.mxu0 0
      %495 = vmatpush1.bf16.msra.mxu0 0
      %496 = vmatprep.subr.bf16.mxu0 0
      %497 = vmatpush1.bf16.msra.mxu0 0
      %498 = vmatprep.subr.bf16.mxu0 0
      %499 = vmatpush1.bf16.msra.mxu0 0
      %500 = vmatprep.subr.bf16.mxu0 0
      %501 = vmatpush1.bf16.msra.mxu0 0
      %502 = vmatprep.subr.bf16.mxu0 0
      %503 = vmatpush1.bf16.msra.mxu0 0
      %504 = vmatprep.mubr.bf16.mxu0 0
      %505 = vmatmul.mubr.bf16.gmra.mrb[0].mxu0 %v467
      %v506 = vpop.f32.mrb[0].mxu0
      %v507 = vadd.f32 0.0, %v506
      %v508 = vpop.f32.mrb[0].mxu0
      %v509 = vpop.f32.mrb[0].mxu0
      %v510 = vadd.f32 0.0, %v509
      %v511 = vpop.f32.mrb[0].mxu0
      %512 = vdwg.mxu0
      %v513 = vadd.f32 %v458, %v507
      %v514 = vadd.f32 %v459, %v510
      %s515 = scalar_lea.vmem %s1, 12
      %v516 = vld [vmem:[%s515] sm:$0x3]
      %vm517 = vsmask.f32 6400
      %v518 = vrot.slane %v243, 1
      %v519 = vrot.slane %v246, 2
      %v520 = vor.u32 %v518, %v519
      %v521 = vrot.slane %v235, 1
      %v522 = vrot.slane %v238, 2
      %v523 = vor.u32 %v521, %v522
      %v524 = vsel %vm517, %v520, %v523
      %v526 = vsel %vm184, %v524, 0
      %v529 = vsel %vm188, %v516, 0
      %531 = vmatprep.subr.bf16.mxu0 0
      %532 = vmatpush1.bf16.msra.mxu0 %v529
      %533 = vmatprep.subr.bf16.mxu0 0
      %534 = vmatpush1.bf16.msra.mxu0 0
      %535 = vmatprep.subr.bf16.mxu0 0
      %536 = vmatpush1.bf16.msra.mxu0 0
      %537 = vmatprep.subr.bf16.mxu0 0
      %538 = vmatpush1.bf16.msra.mxu0 0
      %539 = vmatprep.subr.bf16.mxu0 0
      %540 = vmatpush1.bf16.msra.mxu0 0
      %541 = vmatprep.subr.bf16.mxu0 0
      %542 = vmatpush1.bf16.msra.mxu0 0
      %543 = vmatprep.subr.bf16.mxu0 0
      %544 = vmatpush1.bf16.msra.mxu0 0
      %545 = vmatprep.subr.bf16.mxu0 0
      %546 = vmatpush1.bf16.msra.mxu0 0
      %547 = vmatprep.subr.bf16.mxu0 0
      %548 = vmatpush1.bf16.msra.mxu0 0
      %549 = vmatprep.subr.bf16.mxu0 0
      %550 = vmatpush1.bf16.msra.mxu0 0
      %551 = vmatprep.subr.bf16.mxu0 0
      %552 = vmatpush1.bf16.msra.mxu0 0
      %553 = vmatprep.subr.bf16.mxu0 0
      %554 = vmatpush1.bf16.msra.mxu0 0
      %555 = vmatprep.subr.bf16.mxu0 0
      %556 = vmatpush1.bf16.msra.mxu0 0
      %557 = vmatprep.subr.bf16.mxu0 0
      %558 = vmatpush1.bf16.msra.mxu0 0
      %559 = vmatprep.subr.bf16.mxu0 0
      %560 = vmatpush1.bf16.msra.mxu0 0
      %561 = vmatprep.subr.bf16.mxu0 0
      %562 = vmatpush1.bf16.msra.mxu0 0
      %563 = vmatprep.mubr.bf16.mxu0 0
      %564 = vmatmul.mubr.bf16.gmra.mrb[0].mxu0 %v526
      %v565 = vpop.f32.mrb[0].mxu0
      %v566 = vadd.f32 0.0, %v565
      %v567 = vpop.f32.mrb[0].mxu0
      %v568 = vpop.f32.mrb[0].mxu0
      %v569 = vadd.f32 0.0, %v568
      %v570 = vpop.f32.mrb[0].mxu0
      %571 = vdwg.mxu0
      %v572 = vadd.f32 %v513, %v566
      %v573 = vadd.f32 %v514, %v569
      %v574 = vld [vmem:[%s2] sm:$0x1]
      %v576 = vlaneseq
      %v577 = vshrl.u32 %v576, 7
      %v578 = vsub.s32 0, %v577
      %v579 = vrot.slane %v574, %v578
      %v581 = vadd.f32 %v572, %v579
      %v582 = vadd.f32 %v573, %v579
      %v583 = vmax.f32 %v581, 0.0
      %v584 = vmax.f32 %v582, 0.0
      %585 = vst.msk [vmem:[%s170] sm:$0xff] %vm184, %v583
      %586 = vst.msk [vmem:[%s170 + $0x8] sm:$0xff] %vm184, %v584
      %p587 = scmp.lt.s32.totalorder %s14, 1
      %s588 = scalar_select %p587, %s14, 1
      %s589 = smul.addr %s588, 2
      %s590 = smul.addr %s589, 8
      %s591 = scalar_lea.vmem %s3, %s590
      // Predicated region
      $region33: #{conv_layer_pallas.1} parent=31 // pred_check
        %p592 = pneg %p100
      $region34: #{conv_layer_pallas.1} parent=31 // pred_check_branch
        %594 = sbr.rel (%p592) target = $region36
      $region35: #{conv_layer_pallas.1} parent=31 // pred_region
        _
      $region36: #{conv_layer_pallas.1} parent=31 // pred_fallthru
        _
    $region32: #{conv_layer_pallas.1} parent=5 // pred_fallthru
      _
    %p595 = scmp.le.s32.totalorder 2, %s9
    // Predicated region
    $region37: #{conv_layer_pallas.1} parent=5 // pred_check
      %p596 = pneg %p595
    $region38: #{conv_layer_pallas.1} parent=5 // pred_check_branch
      %598 = sbr.rel (%p596) target = $region40
    $region39: #{conv_layer_pallas.1} parent=5 // pred_region
      %s599 = ssub.s32 %s9, 2
      // Predicated region
      $region41: #{conv_layer_pallas.1} parent=39 // pred_check
        %p600 = pneg %p106
      $region42: #{conv_layer_pallas.1} parent=39 // pred_check_branch
        %602 = sbr.rel (%p600) target = $region44
      $region43: #{conv_layer_pallas.1} parent=39 // pred_region
        %p603 = scmp.lt.s32.totalorder %s15, 1
        %s604 = scalar_select %p603, %s15, 1
        %s605 = smul.addr %s604, 2
        %s606 = smul.addr %s605, 8
        %s607 = scalar_lea.vmem %s3, %s606
      $region44: #{conv_layer_pallas.1} parent=39 // pred_fallthru
        _
    $region40: #{conv_layer_pallas.1} parent=5 // pred_fallthru
      _
  $region6: #{conv_layer_pallas.1} parent=0 // loop_footer
    %s13 = sadd.s32 1, %s9
  $region7: #{conv_layer_pallas.1} parent=0 // loop_footer_branch
    %8 = sbr.rel target = $region3
  $region8: #{conv_layer_pallas.1} parent=0 // loop_exit
    _

</llo_original>
